<compile_context>
chip_gen: v7x
topology: tpu7x:2x2x1
jax: 0.10.0
libtpu: 0.0.40
codegen_flags: <defaults>
</compile_context>

<pallas_src>
import functools
import math

import jax
import jax.numpy as jnp
import numpy as np
from jax.experimental import pallas as pl
from jax.experimental.pallas import tpu as pltpu


def _spatial_pe_kernel(c_ref, w_ref, out_ref):
    """out = sin(c @ w).

    c rows: [x_0..x_{rpf-1}, y_0..y_{rpf-1}, 1, 0...]; w rows: eye-structured
    x-div table, y-div table, +pi/2 phase (for cos lanes), zero padding.  The
    contraction reconstructs angle = coord*div (+ pi/2 on cos lanes) for every
    lane of the folded output, and a single transcendental finishes the tile.
    """
    angle = jnp.dot(c_ref[...], w_ref[...],
                    preferred_element_type=jnp.float32,
                    precision=jax.lax.Precision.HIGHEST)
    out_ref[...] = jnp.sin(angle).astype(out_ref.dtype)


def _fold_factor(d_model: int) -> int:
    """Rows folded into the lane axis so the output last dim is a multiple of 128."""
    return 1 if d_model % 128 == 0 else math.lcm(d_model, 128) // d_model


def _angle_table(d_model: int, rpf: int) -> np.ndarray:
    """Trace-time constant (k_pad, L): rows 0..rpf-1 drive x-lanes, rpf..2rpf-1 drive
    y-lanes (each carrying div_term only on its own folded group), row 2rpf is the
    +pi/2 phase for cos lanes, remaining rows are zero padding (k_pad multiple of 8)."""
    L = rpf * d_model
    lane = np.arange(L)
    j = lane % d_model                     # column inside the original d_model axis
    g = lane // d_model                    # which folded-in row this lane belongs to
    o = j % 4
    # PyTorch: div_term = exp(arange(0, d_model, 4) * -(ln(10000)/d_model))
    div = np.exp(-(4.0 * (j // 4)) * (math.log(10000.0) / d_model))
    use_x = ((o == 0) | (o == 1)).astype(np.float64)
    eye = (np.arange(rpf)[:, None] == g[None, :]).astype(np.float64)   # (rpf, L)
    k = 2 * rpf + 1
    k_pad = -(-k // 8) * 8
    w = np.zeros((k_pad, L), np.float64)
    w[:rpf] = eye * (div * use_x)[None, :]
    w[rpf:2 * rpf] = eye * (div * (1.0 - use_x))[None, :]
    w[2 * rpf] = np.where(o % 2 == 1, np.pi / 2.0, 0.0)
    return w.astype(np.float32)


def _row_tile(rows: int, lanes: int) -> int:
    """Rows per grid step: ~4 MiB of f32 output per block (amortizes ~0.35 us/step
    overhead at 0.8-3.2 TB/s HBM), capped at 8192, multiple of 8, and shrunk when
    needed so the grid has >= 2 steps (megacore sharding on v7x)."""
    target_out_bytes = 4 << 20
    t = min(8192, max(8, (target_out_bytes // (4 * lanes)) // 8 * 8))
    rows8 = -(-rows // 8) * 8
    t = min(t, rows8)
    if rows8 > 8 and -(-rows // t) < 2:
        t = max(8, ((-(-rows // 2)) + 7) // 8 * 8)
    return t


@functools.partial(jax.jit, static_argnames=("d_model",))
def build_spatial_pe(coordinate: jax.Array, d_model: int) -> jax.Array:
    """Pallas port of SpatialEmbedding's buffer construction -> (1, N, d_model) f32.

    The PyTorch module builds `pe` once in __init__ and forward() just returns it,
    so this builder is jit-cached per (N, d_model) and should be called once.
    """
    if d_model % 4 != 0:
        raise ValueError("d_model must be a multiple of 4 (as required by the module).")
    coordinate = coordinate.astype(jnp.float32)
    n = coordinate.shape[0]

    # __init__-time preprocessing (global 2-scalar reduction) in plain JAX; the
    # mean uses only the real N rows, before any padding.
    centered = coordinate - jnp.mean(coordinate, axis=0, keepdims=True)

    rpf = _fold_factor(d_model)
    lanes = rpf * d_model
    rows = -(-n // rpf)                          # folded rows (ceil)
    t = _row_tile(rows, lanes)
    grid = pl.cdiv(rows, t)
    rows_pad = grid * t
    n_pad = rows_pad * rpf

    if n_pad != n:                               # pad rows; sliced off after the kernel
        centered = jnp.pad(centered, ((0, n_pad - n), (0, 0)))

    w = jnp.asarray(_angle_table(d_model, rpf))  # (k_pad, lanes) baked constant
    k_pad = w.shape[0]

    # One combined coordinate block per step: [x-group | y-group | 1 | 0-pad].
    xg = centered[:, 0].reshape(rows_pad, rpf)
    yg = centered[:, 1].reshape(rows_pad, rpf)
    ones = jnp.ones((rows_pad, 1), jnp.float32)
    zpad = jnp.zeros((rows_pad, k_pad - 2 * rpf - 1), jnp.float32)
    c_in = jnp.concatenate([xg, yg, ones, zpad], axis=1)       # (rows_pad, k_pad)

    pe_folded = pl.pallas_call(
        _spatial_pe_kernel,
        out_shape=jax.ShapeDtypeStruct((rows_pad, lanes), jnp.float32),
        grid=(grid,),
        in_specs=[
            pl.BlockSpec((t, k_pad), lambda i: (i, 0)),
            pl.BlockSpec((k_pad, lanes), lambda i: (0, 0)),    # constant block: resident
        ],
        out_specs=pl.BlockSpec((t, lanes), lambda i: (i, 0)),
        compiler_params=pltpu.CompilerParams(
            dimension_semantics=("parallel",),                 # shard rows across TCs
            vmem_limit_bytes=32 * 1024 * 1024,                 # v5e scoped default is 16 MiB
        ),
    )(c_in, w)

    # Row-major (rows_pad, rpf*d_model) layout == (n_pad, d_model); drop padded rows.
    # TODO(synk): optionally emit bf16 here if the downstream consumer tolerates it.
    return pe_folded.reshape(n_pad, d_model)[:n][None]


def _reference(coordinate: jax.Array, d_model: int) -> jax.Array:
    """Plain-JAX port of the PyTorch __init__ buffer construction."""
    coordinate = coordinate.astype(jnp.float32)
    c = coordinate - coordinate.mean(axis=0)
    px, py = c[:, 0:1], c[:, 1:2]
    div = jnp.exp(jnp.arange(0, d_model, 4, dtype=jnp.float32)
                  * (-(math.log(10000.0) / d_model)))
    pe = jnp.zeros((c.shape[0], d_model), jnp.float32)
    pe = pe.at[:, 0::4].set(jnp.sin(px * div))
    pe = pe.at[:, 1::4].set(jnp.cos(px * div))
    pe = pe.at[:, 2::4].set(jnp.sin(py * div))
    pe = pe.at[:, 3::4].set(jnp.cos(py * div))
    return pe[None]


if __name__ == "__main__":
    key = jax.random.PRNGKey(0)
    # The module's forward() implies: coordinate (N, 2) and a hidden size d_model.
    n, d_model = 64, 32                   # 64 spatial locations, hidden = 32
    coordinate = jax.random.uniform(key, (n, 2), dtype=jnp.float32,
                                    minval=0.0, maxval=10.0)

    pe = jax.block_until_ready(build_spatial_pe(coordinate, d_model))
    ref = _reference(coordinate, d_model)
    assert pe.shape == (1, n, d_model), pe.shape
    assert pe.dtype == jnp.float32, pe.dtype
    assert jnp.allclose(pe, ref, atol=1e-5, rtol=1e-5), "fold path mismatch vs reference"

    # Fold + N-padding path (N not a multiple of rpf).
    pe1 = jax.block_until_ready(build_spatial_pe(coordinate[:63], 32))
    assert jnp.allclose(pe1, _reference(coordinate[:63], 32),
                        atol=1e-5, rtol=1e-5), "fold+pad path mismatch vs reference"

    # No-fold path (d_model multiple of 128) with row padding.
    pe2 = jax.block_until_ready(build_spatial_pe(coordinate[:15], 128))
    assert jnp.allclose(pe2, _reference(coordinate[:15], 128),
                        atol=1e-5, rtol=1e-5), "rpf=1 path mismatch vs reference"

    print("KERNEL_OK")
</pallas_src>

<mosaic_0001>
module attributes {stable_mosaic.version = 11 : i64} {
  func.func @_spatial_pe_kernel(%arg0: i32, %arg1: memref<8x16xf32, #tpu.memory_space<vmem>>, %arg2: memref<16x128xf32, #tpu.memory_space<vmem>>, %arg3: memref<8x128xf32, #tpu.memory_space<vmem>>) attributes {dimension_semantics = [#tpu.dimension_semantics<parallel>], iteration_bounds = array<i64: 2>, scalar_prefetch = 0 : i64, scratch_operands = 0 : i64, tpu.core_type = #tpu.core_type<tc>, window_params = [{transform_indices = @transform_0, window_bounds = array<i64: 8, 16>}, {pipeline_mode = #tpu.pipeline_mode<synchronous>, transform_indices = @transform_1, window_bounds = array<i64: 16, 128>}, {transform_indices = @transform_2, window_bounds = array<i64: 8, 128>}]} {
    %c0 = arith.constant 0 : index
    %c0_0 = arith.constant 0 : index
    %0 = vector.load %arg1[%c0, %c0_0] : memref<8x16xf32, #tpu.memory_space<vmem>>, vector<8x16xf32>
    %c0_1 = arith.constant 0 : index
    %c0_2 = arith.constant 0 : index
    %1 = vector.load %arg2[%c0_1, %c0_2] : memref<16x128xf32, #tpu.memory_space<vmem>>, vector<16x128xf32>
    %cst = arith.constant dense<0.000000e+00> : vector<8x128xf32>
    %2 = tpu.matmul %0, %1, %cst {dimension_numbers = #tpu.dot_dimension_numbers<[1], [0], [0], [1], [0, 0, 1, 1], [], []>, precision = #tpu.contract_precision<fp32>} : vector<8x16xf32>, vector<16x128xf32>, vector<8x128xf32> -> vector<8x128xf32>
    %3 = math.sin %2 : vector<8x128xf32>
    %c0_3 = arith.constant 0 : index
    %c0_4 = arith.constant 0 : index
    %4 = vector.load %arg3[%c0_3, %c0_4] : memref<8x128xf32, #tpu.memory_space<vmem>>, vector<8x128xf32>
    tpu.vector_store %arg3[%c0_3, %c0_4], %3 {strides = array<i32>} : memref<8x128xf32, #tpu.memory_space<vmem>>, vector<8x128xf32>,
    return
  }
  func.func @transform_0(%arg0: i32) -> (i32, i32) {
    %c0_i32 = arith.constant 0 : i32
    %c0_i32_0 = arith.constant 0 : i32
    return %arg0, %c0_i32 : i32, i32
  }
  func.func @transform_1(%arg0: i32) -> (i32, i32) {
    %c0_i32 = arith.constant 0 : i32
    %c0_i32_0 = arith.constant 0 : i32
    %c0_i32_1 = arith.constant 0 : i32
    return %c0_i32, %c0_i32_0 : i32, i32
  }
  func.func @transform_2(%arg0: i32) -> (i32, i32) {
    %c0_i32 = arith.constant 0 : i32
    %c0_i32_0 = arith.constant 0 : i32
    return %arg0, %c0_i32 : i32, i32
  }
}

</mosaic_0001>

<llo_original>
// kernel: squeeze.2
$region0: #{squeeze.2}
  %s0 = inlined_call_operand.vmem [shape: f32[64], index: 0, kind: input, shape index: {}]
  %s1 = inlined_call_operand.vmem [shape: f32[16,4], index: 1, kind: output, shape index: {}]
  $region1: #{squeeze.2} parent=0
    #allocation0 [shape = 'u8[4096]{0}', space=vmem, size = 0x1000, scoped, tag = 'scoped mem for input reshape']
    %s3 = sshllo.u32 0, 1
    %v4 = vld [vmem:[%s0] sm:%s3]
    %5 = vst [vmem:[#allocation0] sm:%s3] %v4
    %v6 = vld [vmem:[#allocation0] sm:$0x1]
    %vm7 = vcmask 31744
    %8 = vst.msk [vmem:[%s1] sm:$0x1] %vm7, %v6
    %v9 = vld [vmem:[#allocation0] sm:$0x1]
    %10 = vrot.lane.b32.xlu0 %v9, 124
    %v11 = vpop.permute.xlu0 %10
    %vm12 = vcmask 31744
    %s13 = scalar_lea.vmem %s1, 1
    %14 = vst.msk [vmem:[%s13] sm:$0x1] %vm12, %v11
    %v15 = vld [vmem:[#allocation0] sm:$0x1]
    %16 = vrot.lane.b32.xlu0 %v15, 120
    %v17 = vpop.permute.xlu0 %16
    %vm18 = vcmask 31744
    %s19 = scalar_lea.vmem %s1, 2
    %20 = vst.msk [vmem:[%s19] sm:$0x1] %vm18, %v17
    %v21 = vld [vmem:[#allocation0] sm:$0x1]
    %22 = vrot.lane.b32.xlu0 %v21, 116
    %v23 = vpop.permute.xlu0 %22
    %vm24 = vcmask 31744
    %s25 = scalar_lea.vmem %s1, 3
    %26 = vst.msk [vmem:[%s25] sm:$0x1] %vm24, %v23
    %v27 = vld [vmem:[#allocation0] sm:$0x1]
    %28 = vrot.lane.b32.xlu0 %v27, 112
    %v29 = vpop.permute.xlu0 %28
    %vm30 = vcmask 31744
    %s31 = scalar_lea.vmem %s1, 4
    %32 = vst.msk [vmem:[%s31] sm:$0x1] %vm30, %v29
    %v33 = vld [vmem:[#allocation0] sm:$0x1]
    %34 = vrot.lane.b32.xlu0 %v33, 108
    %v35 = vpop.permute.xlu0 %34
    %vm36 = vcmask 31744
    %s37 = scalar_lea.vmem %s1, 5
    %38 = vst.msk [vmem:[%s37] sm:$0x1] %vm36, %v35
    %v39 = vld [vmem:[#allocation0] sm:$0x1]
    %40 = vrot.lane.b32.xlu0 %v39, 104
    %v41 = vpop.permute.xlu0 %40
    %vm42 = vcmask 31744
    %s43 = scalar_lea.vmem %s1, 6
    %44 = vst.msk [vmem:[%s43] sm:$0x1] %vm42, %v41
    %v45 = vld [vmem:[#allocation0] sm:$0x1]
    %46 = vrot.lane.b32.xlu0 %v45, 100
    %v47 = vpop.permute.xlu0 %46
    %vm48 = vcmask 31744
    %s49 = scalar_lea.vmem %s1, 7
    %50 = vst.msk [vmem:[%s49] sm:$0x1] %vm48, %v47
    %v51 = vld [vmem:[#allocation0] sm:$0x1]
    %52 = vrot.lane.b32.xlu0 %v51, 96
    %v53 = vpop.permute.xlu0 %52
    %vm54 = vcmask 31744
    %s55 = scalar_lea.vmem %s1, 8
    %56 = vst.msk [vmem:[%s55] sm:$0x1] %vm54, %v53
    %v57 = vld [vmem:[#allocation0] sm:$0x1]
    %58 = vrot.lane.b32.xlu0 %v57, 92
    %v59 = vpop.permute.xlu0 %58
    %vm60 = vcmask 31744
    %s61 = scalar_lea.vmem %s1, 9
    %62 = vst.msk [vmem:[%s61] sm:$0x1] %vm60, %v59
    %v63 = vld [vmem:[#allocation0] sm:$0x1]
    %64 = vrot.lane.b32.xlu0 %v63, 88
    %v65 = vpop.permute.xlu0 %64
    %vm66 = vcmask 31744
    %s67 = scalar_lea.vmem %s1, 10
    %68 = vst.msk [vmem:[%s67] sm:$0x1] %vm66, %v65
    %v69 = vld [vmem:[#allocation0] sm:$0x1]
    %70 = vrot.lane.b32.xlu0 %v69, 84
    %v71 = vpop.permute.xlu0 %70
    %vm72 = vcmask 31744
    %s73 = scalar_lea.vmem %s1, 11
    %74 = vst.msk [vmem:[%s73] sm:$0x1] %vm72, %v71
    %v75 = vld [vmem:[#allocation0] sm:$0x1]
    %76 = vrot.lane.b32.xlu0 %v75, 80
    %v77 = vpop.permute.xlu0 %76
    %vm78 = vcmask 31744
    %s79 = scalar_lea.vmem %s1, 12
    %80 = vst.msk [vmem:[%s79] sm:$0x1] %vm78, %v77
    %v81 = vld [vmem:[#allocation0] sm:$0x1]
    %82 = vrot.lane.b32.xlu0 %v81, 76
    %v83 = vpop.permute.xlu0 %82
    %vm84 = vcmask 31744
    %s85 = scalar_lea.vmem %s1, 13
    %86 = vst.msk [vmem:[%s85] sm:$0x1] %vm84, %v83
    %v87 = vld [vmem:[#allocation0] sm:$0x1]
    %88 = vrot.lane.b32.xlu0 %v87, 72
    %v89 = vpop.permute.xlu0 %88
    %vm90 = vcmask 31744
    %s91 = scalar_lea.vmem %s1, 14
    %92 = vst.msk [vmem:[%s91] sm:$0x1] %vm90, %v89
    %v93 = vld [vmem:[#allocation0] sm:$0x1]
    %94 = vrot.lane.b32.xlu0 %v93, 68
    %v95 = vpop.permute.xlu0 %94
    %vm96 = vcmask 31744
    %s97 = scalar_lea.vmem %s1, 15
    %98 = vst.msk [vmem:[%s97] sm:$0x1] %vm96, %v95

// kernel: build_spatial_pe.1
$region0: #{build_spatial_pe.1}
  #allocation0 [shape = 'u32[]', space=smem, size = 0x4, offset = 0x4, fixed_abs, tag = 'smem constant byte address 0x4 - core index']
  #allocation1 [shape = 'u32[144,128]{1,0:T(1,128)}', space=vmem, size = 0x12000, scoped, tag = 'internal scratch']
  %s0 = inlined_call_operand.vmem [shape: f32[16,16], index: 0, kind: input, shape index: {}]
  %s1 = inlined_call_operand.vmem [shape: f32[16,128], index: 1, kind: input, shape index: {}]
  %s2 = inlined_call_operand.vmem [shape: f32[16,128], index: 2, kind: output, shape index: {}]
  %s3 = sld [smem:[#allocation0]]
  $region41: #{build_spatial_pe.1} parent=0
    _
  %s5 = ssub.s32 1, %s3
  %s6 = scalar_select 0, %s5, %s3
  loop: start=0, step=1, limit=4
  $region2: #{build_spatial_pe.1} parent=0 // loop_pre_header
    _
  $region3: #{build_spatial_pe.1} parent=0 // loop_header
    %s8 = sphi 0, %s12
    %p9 = scmp.ge.s32.totalorder %s8, 4
    %s18 = sphi 0, %s20
    %s21 = sphi 0, %s18
    %s22 = sphi 0, %s21
    %s38 = sphi 0, %s22
    %s42 = sphi 0, %s42
    %s44 = sphi 0, %s42
    %s45 = sphi 0, %s44
    %s59 = sphi 0, %s45
    %s65 = sphi 0, %s67
    %s68 = sphi 0, %s65
    %s69 = sphi 0, %s68
    %s85 = sphi 0, %s69
  $region4: #{build_spatial_pe.1} parent=0 // loop_header_branch
    %11 = sbr.rel (%p9) target = $region8
  $region5: #{build_spatial_pe.1} parent=0 // loop_body
    %s13 = ssub.s32 %s8, 1
    %s14 = ssub.s32 %s8, 2
    %s15 = sadd.s32 %s8, 1
    %s16 = ssub.s32 %s8, %s15
    %p17 = scmp.eq.s32.totalorder %s16, 0
    %s19 = sadd.s32 %s18, 1
    %s20 = scalar_select %p17, %s18, %s19
    %p23 = pneg %p17
    %p24 = scmp.eq.s32.totalorder %s8, 1
    %p25 = por %p23, %p24
    %p26 = scmp.ne.s32.totalorder %s18, %s21
    %p27 = scmp.eq.s32.totalorder %s8, 0
    %p28 = por %p26, %p27
    %p29 = scmp.ne.s32.totalorder %s18, %s21
    %p30 = scmp.eq.s32.totalorder %s13, 1
    %p31 = por %p29, %p30
    %p32 = scmp.ne.s32.totalorder %s21, %s22
    %p33 = scmp.eq.s32.totalorder %s13, 0
    %p34 = por %p32, %p33
    %p35 = scmp.ne.s32.totalorder %s21, %s22
    %p36 = scmp.eq.s32.totalorder %s14, 1
    %p37 = por %p35, %p36
    %p39 = scmp.ne.s32.totalorder %s22, %s38
    %p40 = scmp.eq.s32.totalorder %s14, 0
    %p41 = por %p39, %p40
    %s43 = sadd.s32 %s42, 1
    %p46 = scmp.eq.s32.totalorder %s8, 1
    %p47 = scmp.ne.s32.totalorder %s42, %s44
    %p48 = scmp.eq.s32.totalorder %s8, 0
    %p49 = por %p47, %p48
    %p50 = scmp.ne.s32.totalorder %s42, %s44
    %p51 = scmp.eq.s32.totalorder %s13, 1
    %p52 = por %p50, %p51
    %p53 = scmp.ne.s32.totalorder %s44, %s45
    %p54 = scmp.eq.s32.totalorder %s13, 0
    %p55 = por %p53, %p54
    %p56 = scmp.ne.s32.totalorder %s44, %s45
    %p57 = scmp.eq.s32.totalorder %s14, 1
    %p58 = por %p56, %p57
    %p60 = scmp.ne.s32.totalorder %s45, %s59
    %p61 = scmp.eq.s32.totalorder %s14, 0
    %p62 = por %p60, %p61
    %s63 = ssub.s32 %s8, %s15
    %p64 = scmp.eq.s32.totalorder %s63, 0
    %s66 = sadd.s32 %s65, 1
    %s67 = scalar_select %p64, %s65, %s66
    %p70 = pneg %p64
    %p71 = scmp.eq.s32.totalorder %s8, 1
    %p72 = por %p70, %p71
    %p73 = scmp.ne.s32.totalorder %s65, %s68
    %p74 = scmp.eq.s32.totalorder %s8, 0
    %p75 = por %p73, %p74
    %p76 = scmp.ne.s32.totalorder %s65, %s68
    %p77 = scmp.eq.s32.totalorder %s13, 1
    %p78 = por %p76, %p77
    %p79 = scmp.ne.s32.totalorder %s68, %s69
    %p80 = scmp.eq.s32.totalorder %s13, 0
    %p81 = por %p79, %p80
    %p82 = scmp.ne.s32.totalorder %s68, %s69
    %p83 = scmp.eq.s32.totalorder %s14, 1
    %p84 = por %p82, %p83
    %p86 = scmp.ne.s32.totalorder %s69, %s85
    %p87 = scmp.eq.s32.totalorder %s14, 0
    %p88 = por %p86, %p87
    %p89 = scmp.le.s32.totalorder 1, %s8
    %p90 = scmp.lt.s32.totalorder %s8, 3
    %p91 = pnand %p89, %p90
    %p92 = pneg %p91
    // Predicated region
    $region9: #{build_spatial_pe.1} parent=5 // pred_check
      _
    $region10: #{build_spatial_pe.1} parent=5 // pred_check_branch
      %94 = sbr.rel (%p91) target = $region12
    $region11: #{build_spatial_pe.1} parent=5 // pred_region
      %s95 = ssub.s32 %s8, 1
      // Predicated region
      $region13: #{build_spatial_pe.1} parent=11 // pred_check
        %p96 = pneg %p55
      $region14: #{build_spatial_pe.1} parent=11 // pred_check_branch
        %98 = sbr.rel (%p96) target = $region16
      $region15: #{build_spatial_pe.1} parent=11 // pred_region
        _
      $region16: #{build_spatial_pe.1} parent=11 // pred_fallthru
        _
    $region12: #{build_spatial_pe.1} parent=5 // pred_fallthru
      _
    %p99 = scmp.lt.s32.totalorder %s8, 2
    // Predicated region
    $region17: #{build_spatial_pe.1} parent=5 // pred_check
      %p100 = pneg %p99
    $region18: #{build_spatial_pe.1} parent=5 // pred_check_branch
      %102 = sbr.rel (%p100) target = $region20
    $region19: #{build_spatial_pe.1} parent=5 // pred_region
      // Predicated region
      $region21: #{build_spatial_pe.1} parent=19 // pred_check
        %p103 = pneg %p28
      $region22: #{build_spatial_pe.1} parent=19 // pred_check_branch
        %105 = sbr.rel (%p103) target = $region24
      $region23: #{build_spatial_pe.1} parent=19 // pred_region
        %p106 = scmp.lt.s32.totalorder %s8, 1
        %s107 = scalar_select %p106, %s8, 1
        %s108 = smul.addr %s107, 8
        %s109 = scalar_lea.vmem %s0, %s108
      $region24: #{build_spatial_pe.1} parent=19 // pred_fallthru
        _
    $region20: #{build_spatial_pe.1} parent=5 // pred_fallthru
      _
    %p110 = scmp.le.s32.totalorder 1, %s8
    %p111 = scmp.lt.s32.totalorder %s8, 3
    %p112 = pnand %p110, %p111
    %p113 = pneg %p112
    // Predicated region
    $region25: #{build_spatial_pe.1} parent=5 // pred_check
      _
    $region26: #{build_spatial_pe.1} parent=5 // pred_check_branch
      %115 = sbr.rel (%p112) target = $region28
    $region27: #{build_spatial_pe.1} parent=5 // pred_region
      %s116 = ssub.s32 %s8, 1
      %p117 = scmp.lt.s32.totalorder %s13, 1
      %s118 = scalar_select %p117, %s13, 1
      %s119 = smul.addr %s118, 8
      %s120 = scalar_lea.vmem %s0, %s119
      %p121 = pneg %p34
      %p122 = pneg %p31
      %p123 = pneg %p55
      %p124 = pneg %p52
      %p125 = pneg %p81
      %p126 = pneg %p78
      %p127 = scmp.lt.s32.totalorder %s13, 1
      %s128 = scalar_select %p127, %s13, 1
      %s129 = smul.addr %s128, 8
      %s130 = scalar_lea.vmem %s2, %s129
      %p131 = scmp.lt.s32.totalorder %s13, 1
      %s132 = scalar_select %p131, %s13, 1
      %s133 = smul.addr %s132, 8
      %s134 = scalar_lea.vmem %s0, %s133
      %p135 = scmp.lt.s32.totalorder %s13, 1
      %s136 = scalar_select %p135, %s13, 1
      %s137 = smul.addr %s136, 8
      %s138 = scalar_lea.vmem %s2, %s137
      %v139 = vld [vmem:[%s134] sm:$0xff]
      %v140 = vld [vmem:[%s1] sm:$0xff]
      %v141 = vld [vmem:[%s1 + $0x8] sm:$0xff]
      %vm142 = vcmask 130048
      %v144 = vsel %vm142, %v139, 0
      %146 = vmatprep.subr.mxu0 0.0
      %v147 = vand.u32 %v140, 4294901760
      %148 = vmatpush1.msra.mxu0 %v147
      %149 = vmatprep.subr.mxu0 0.0
      %v150 = vand.u32 %v141, 4294901760
      %151 = vmatpush1.msra.mxu0 %v150
      %152 = vmatprep.subr.mxu0 0.0
      %153 = vmatpush1.msra.mxu0 0.0
      %154 = vmatprep.subr.mxu0 0.0
      %155 = vmatpush1.msra.mxu0 0.0
      %156 = vmatprep.subr.mxu0 0.0
      %157 = vmatpush1.msra.mxu0 0.0
      %158 = vmatprep.subr.mxu0 0.0
      %159 = vmatpush1.msra.mxu0 0.0
      %160 = vmatprep.subr.mxu0 0.0
      %161 = vmatpush1.msra.mxu0 0.0
      %162 = vmatprep.subr.mxu0 0.0
      %163 = vmatpush1.msra.mxu0 0.0
      %164 = vmatprep.subr.mxu0 0.0
      %165 = vmatpush1.msra.mxu0 0.0
      %166 = vmatprep.subr.mxu0 0.0
      %167 = vmatpush1.msra.mxu0 0.0
      %168 = vmatprep.subr.mxu0 0.0
      %169 = vmatpush1.msra.mxu0 0.0
      %170 = vmatprep.subr.mxu0 0.0
      %171 = vmatpush1.msra.mxu0 0.0
      %172 = vmatprep.subr.mxu0 0.0
      %173 = vmatpush1.msra.mxu0 0.0
      %174 = vmatprep.subr.mxu0 0.0
      %175 = vmatpush1.msra.mxu0 0.0
      %176 = vmatprep.subr.mxu0 0.0
      %177 = vmatpush1.msra.mxu0 0.0
      %178 = vmatprep.subr.mxu0 0.0
      %179 = vmatpush1.msra.mxu0 0.0
      %180 = vmatprep.subr.mxu0 0.0
      %181 = vmatpush1.msra.mxu0 0.0
      %182 = vmatprep.subr.mxu0 0.0
      %183 = vmatpush1.msra.mxu0 0.0
      %184 = vmatprep.subr.mxu0 0.0
      %185 = vmatpush1.msra.mxu0 0.0
      %186 = vmatprep.subr.mxu0 0.0
      %187 = vmatpush1.msra.mxu0 0.0
      %188 = vmatprep.subr.mxu0 0.0
      %189 = vmatpush1.msra.mxu0 0.0
      %190 = vmatprep.subr.mxu0 0.0
      %191 = vmatpush1.msra.mxu0 0.0
      %192 = vmatprep.subr.mxu0 0.0
      %193 = vmatpush1.msra.mxu0 0.0
      %194 = vmatprep.subr.mxu0 0.0
      %195 = vmatpush1.msra.mxu0 0.0
      %196 = vmatprep.subr.mxu0 0.0
      %197 = vmatpush1.msra.mxu0 0.0
      %198 = vmatprep.subr.mxu0 0.0
      %199 = vmatpush1.msra.mxu0 0.0
      %200 = vmatprep.subr.mxu0 0.0
      %201 = vmatpush1.msra.mxu0 0.0
      %202 = vmatprep.subr.mxu0 0.0
      %203 = vmatpush1.msra.mxu0 0.0
      %204 = vmatprep.subr.mxu0 0.0
      %205 = vmatpush1.msra.mxu0 0.0
      %206 = vmatprep.subr.mxu0 0.0
      %207 = vmatpush1.msra.mxu0 0.0
      %208 = vmatprep.subr.mxu0 0.0
      %209 = vmatpush1.msra.mxu0 0.0
      %210 = vmatprep.subr.mxu0 0.0
      %211 = vmatpush1.msra.mxu0 0.0
      %212 = vmatprep.mubr.f32.mxu0 0.0
      %v213 = vand.u32 %v144, 4294901760
      %v214 = vsub.f32 %v144, %v213
      %v215 = vand.u32 %v214, 4294901760
      %v216 = vsub.f32 %v214, %v215
      %v217 = vand.u32 %v216, 4294901760
      %218 = vmatmul.mubr.f32.gmra.mrb[0].mxu0 %v217
      %v219 = vpop.f32.mrb[0].mxu0
      %v220 = vadd.f32 0.0, %v219
      %v221 = vpop.f32.mrb[0].mxu0
      %222 = vdwg.mxu0
      %223 = vmatprep.subr.mxu0 0.0
      %v224 = vand.u32 %v140, 4294901760
      %v225 = vsub.f32 %v140, %v224
      %v226 = vand.u32 %v225, 4294901760
      %v227 = vsub.f32 %v225, %v226
      %v228 = vand.u32 %v227, 4294901760
      %229 = vmatpush1.msra.mxu0 %v228
      %230 = vmatprep.subr.mxu0 0.0
      %v231 = vand.u32 %v141, 4294901760
      %v232 = vsub.f32 %v141, %v231
      %v233 = vand.u32 %v232, 4294901760
      %v234 = vsub.f32 %v232, %v233
      %v235 = vand.u32 %v234, 4294901760
      %236 = vmatpush1.msra.mxu0 %v235
      %237 = vmatprep.subr.mxu0 0.0
      %238 = vmatpush1.msra.mxu0 0.0
      %239 = vmatprep.subr.mxu0 0.0
      %240 = vmatpush1.msra.mxu0 0.0
      %241 = vmatprep.subr.mxu0 0.0
      %242 = vmatpush1.msra.mxu0 0.0
      %243 = vmatprep.subr.mxu0 0.0
      %244 = vmatpush1.msra.mxu0 0.0
      %245 = vmatprep.subr.mxu0 0.0
      %246 = vmatpush1.msra.mxu0 0.0
      %247 = vmatprep.subr.mxu0 0.0
      %248 = vmatpush1.msra.mxu0 0.0
      %249 = vmatprep.subr.mxu0 0.0
      %250 = vmatpush1.msra.mxu0 0.0
      %251 = vmatprep.subr.mxu0 0.0
      %252 = vmatpush1.msra.mxu0 0.0
      %253 = vmatprep.subr.mxu0 0.0
      %254 = vmatpush1.msra.mxu0 0.0
      %255 = vmatprep.subr.mxu0 0.0
      %256 = vmatpush1.msra.mxu0 0.0
      %257 = vmatprep.subr.mxu0 0.0
      %258 = vmatpush1.msra.mxu0 0.0
      %259 = vmatprep.subr.mxu0 0.0
      %260 = vmatpush1.msra.mxu0 0.0
      %261 = vmatprep.subr.mxu0 0.0
      %262 = vmatpush1.msra.mxu0 0.0
      %263 = vmatprep.subr.mxu0 0.0
      %264 = vmatpush1.msra.mxu0 0.0
      %265 = vmatprep.subr.mxu0 0.0
      %266 = vmatpush1.msra.mxu0 0.0
      %267 = vmatprep.subr.mxu0 0.0
      %268 = vmatpush1.msra.mxu0 0.0
      %269 = vmatprep.subr.mxu0 0.0
      %270 = vmatpush1.msra.mxu0 0.0
      %271 = vmatprep.subr.mxu0 0.0
      %272 = vmatpush1.msra.mxu0 0.0
      %273 = vmatprep.subr.mxu0 0.0
      %274 = vmatpush1.msra.mxu0 0.0
      %275 = vmatprep.subr.mxu0 0.0
      %276 = vmatpush1.msra.mxu0 0.0
      %277 = vmatprep.subr.mxu0 0.0
      %278 = vmatpush1.msra.mxu0 0.0
      %279 = vmatprep.subr.mxu0 0.0
      %280 = vmatpush1.msra.mxu0 0.0
      %281 = vmatprep.subr.mxu0 0.0
      %282 = vmatpush1.msra.mxu0 0.0
      %283 = vmatprep.subr.mxu0 0.0
      %284 = vmatpush1.msra.mxu0 0.0
      %285 = vmatprep.subr.mxu0 0.0
      %286 = vmatpush1.msra.mxu0 0.0
      %287 = vmatprep.subr.mxu0 0.0
      %288 = vmatpush1.msra.mxu0 0.0
      %289 = vmatprep.subr.mxu0 0.0
      %290 = vmatpush1.msra.mxu0 0.0
      %291 = vmatprep.subr.mxu0 0.0
      %292 = vmatpush1.msra.mxu0 0.0
      %293 = vmatprep.subr.mxu0 0.0
      %294 = vmatpush1.msra.mxu0 0.0
      %295 = vmatprep.subr.mxu0 0.0
      %296 = vmatpush1.msra.mxu0 0.0
      %297 = vmatprep.mubr.f32.mxu0 0.0
      %v298 = vand.u32 %v144, 4294901760
      %299 = vmatmul.mubr.f32.gmra.mrb[0].mxu0 %v298
      %v300 = vpop.f32.mrb[0].mxu0
      %v301 = vadd.f32 %v220, %v300
      %v302 = vpop.f32.mrb[0].mxu0
      %303 = vdwg.mxu0
      %304 = vmatprep.subr.mxu0 0.0
      %v305 = vand.u32 %v140, 4294901760
      %v306 = vsub.f32 %v140, %v305
      %307 = vmatpush1.msra.mxu0 %v306
      %308 = vmatprep.subr.mxu0 0.0
      %v309 = vand.u32 %v141, 4294901760
      %v310 = vsub.f32 %v141, %v309
      %311 = vmatpush1.msra.mxu0 %v310
      %312 = vmatprep.subr.mxu0 0.0
      %313 = vmatpush1.msra.mxu0 0.0
      %314 = vmatprep.subr.mxu0 0.0
      %315 = vmatpush1.msra.mxu0 0.0
      %316 = vmatprep.subr.mxu0 0.0
      %317 = vmatpush1.msra.mxu0 0.0
      %318 = vmatprep.subr.mxu0 0.0
      %319 = vmatpush1.msra.mxu0 0.0
      %320 = vmatprep.subr.mxu0 0.0
      %321 = vmatpush1.msra.mxu0 0.0
      %322 = vmatprep.subr.mxu0 0.0
      %323 = vmatpush1.msra.mxu0 0.0
      %324 = vmatprep.subr.mxu0 0.0
      %325 = vmatpush1.msra.mxu0 0.0
      %326 = vmatprep.subr.mxu0 0.0
      %327 = vmatpush1.msra.mxu0 0.0
      %328 = vmatprep.subr.mxu0 0.0
      %329 = vmatpush1.msra.mxu0 0.0
      %330 = vmatprep.subr.mxu0 0.0
      %331 = vmatpush1.msra.mxu0 0.0
      %332 = vmatprep.subr.mxu0 0.0
      %333 = vmatpush1.msra.mxu0 0.0
      %334 = vmatprep.subr.mxu0 0.0
      %335 = vmatpush1.msra.mxu0 0.0
      %336 = vmatprep.subr.mxu0 0.0
      %337 = vmatpush1.msra.mxu0 0.0
      %338 = vmatprep.subr.mxu0 0.0
      %339 = vmatpush1.msra.mxu0 0.0
      %340 = vmatprep.subr.mxu0 0.0
      %341 = vmatpush1.msra.mxu0 0.0
      %342 = vmatprep.subr.mxu0 0.0
      %343 = vmatpush1.msra.mxu0 0.0
      %344 = vmatprep.subr.mxu0 0.0
      %345 = vmatpush1.msra.mxu0 0.0
      %346 = vmatprep.subr.mxu0 0.0
      %347 = vmatpush1.msra.mxu0 0.0
      %348 = vmatprep.subr.mxu0 0.0
      %349 = vmatpush1.msra.mxu0 0.0
      %350 = vmatprep.subr.mxu0 0.0
      %351 = vmatpush1.msra.mxu0 0.0
      %352 = vmatprep.subr.mxu0 0.0
      %353 = vmatpush1.msra.mxu0 0.0
      %354 = vmatprep.subr.mxu0 0.0
      %355 = vmatpush1.msra.mxu0 0.0
      %356 = vmatprep.subr.mxu0 0.0
      %357 = vmatpush1.msra.mxu0 0.0
      %358 = vmatprep.subr.mxu0 0.0
      %359 = vmatpush1.msra.mxu0 0.0
      %360 = vmatprep.subr.mxu0 0.0
      %361 = vmatpush1.msra.mxu0 0.0
      %362 = vmatprep.subr.mxu0 0.0
      %363 = vmatpush1.msra.mxu0 0.0
      %364 = vmatprep.subr.mxu0 0.0
      %365 = vmatpush1.msra.mxu0 0.0
      %366 = vmatprep.subr.mxu0 0.0
      %367 = vmatpush1.msra.mxu0 0.0
      %368 = vmatprep.subr.mxu0 0.0
      %369 = vmatpush1.msra.mxu0 0.0
      %370 = vmatprep.subr.mxu0 0.0
      %371 = vmatpush1.msra.mxu0 0.0
      %372 = vmatprep.mubr.f32.mxu0 0.0
      %v373 = vand.u32 %v144, 4294901760
      %v374 = vsub.f32 %v144, %v373
      %375 = vmatmul.mubr.f32.gmra.mrb[0].mxu0 %v374
      %v376 = vpop.f32.mrb[0].mxu0
      %v377 = vadd.f32 %v301, %v376
      %v378 = vpop.f32.mrb[0].mxu0
      %379 = vdwg.mxu0
      %380 = vmatprep.subr.mxu0 0.0
      %v381 = vand.u32 %v140, 4294901760
      %382 = vmatpush1.msra.mxu0 %v381
      %383 = vmatprep.subr.mxu0 0.0
      %v384 = vand.u32 %v141, 4294901760
      %385 = vmatpush1.msra.mxu0 %v384
      %386 = vmatprep.subr.mxu0 0.0
      %387 = vmatpush1.msra.mxu0 0.0
      %388 = vmatprep.subr.mxu0 0.0
      %389 = vmatpush1.msra.mxu0 0.0
      %390 = vmatprep.subr.mxu0 0.0
      %391 = vmatpush1.msra.mxu0 0.0
      %392 = vmatprep.subr.mxu0 0.0
      %393 = vmatpush1.msra.mxu0 0.0
      %394 = vmatprep.subr.mxu0 0.0
      %395 = vmatpush1.msra.mxu0 0.0
      %396 = vmatprep.subr.mxu0 0.0
      %397 = vmatpush1.msra.mxu0 0.0
      %398 = vmatprep.subr.mxu0 0.0
      %399 = vmatpush1.msra.mxu0 0.0
      %400 = vmatprep.subr.mxu0 0.0
      %401 = vmatpush1.msra.mxu0 0.0
      %402 = vmatprep.subr.mxu0 0.0
      %403 = vmatpush1.msra.mxu0 0.0
      %404 = vmatprep.subr.mxu0 0.0
      %405 = vmatpush1.msra.mxu0 0.0
      %406 = vmatprep.subr.mxu0 0.0
      %407 = vmatpush1.msra.mxu0 0.0
      %408 = vmatprep.subr.mxu0 0.0
      %409 = vmatpush1.msra.mxu0 0.0
      %410 = vmatprep.subr.mxu0 0.0
      %411 = vmatpush1.msra.mxu0 0.0
      %412 = vmatprep.subr.mxu0 0.0
      %413 = vmatpush1.msra.mxu0 0.0
      %414 = vmatprep.subr.mxu0 0.0
      %415 = vmatpush1.msra.mxu0 0.0
      %416 = vmatprep.subr.mxu0 0.0
      %417 = vmatpush1.msra.mxu0 0.0
      %418 = vmatprep.subr.mxu0 0.0
      %419 = vmatpush1.msra.mxu0 0.0
      %420 = vmatprep.subr.mxu0 0.0
      %421 = vmatpush1.msra.mxu0 0.0
      %422 = vmatprep.subr.mxu0 0.0
      %423 = vmatpush1.msra.mxu0 0.0
      %424 = vmatprep.subr.mxu0 0.0
      %425 = vmatpush1.msra.mxu0 0.0
      %426 = vmatprep.subr.mxu0 0.0
      %427 = vmatpush1.msra.mxu0 0.0
      %428 = vmatprep.subr.mxu0 0.0
      %429 = vmatpush1.msra.mxu0 0.0
      %430 = vmatprep.subr.mxu0 0.0
      %431 = vmatpush1.msra.mxu0 0.0
      %432 = vmatprep.subr.mxu0 0.0
      %433 = vmatpush1.msra.mxu0 0.0
      %434 = vmatprep.subr.mxu0 0.0
      %435 = vmatpush1.msra.mxu0 0.0
      %436 = vmatprep.subr.mxu0 0.0
      %437 = vmatpush1.msra.mxu0 0.0
      %438 = vmatprep.subr.mxu0 0.0
      %439 = vmatpush1.msra.mxu0 0.0
      %440 = vmatprep.subr.mxu0 0.0
      %441 = vmatpush1.msra.mxu0 0.0
      %442 = vmatprep.subr.mxu0 0.0
      %443 = vmatpush1.msra.mxu0 0.0
      %444 = vmatprep.subr.mxu0 0.0
      %445 = vmatpush1.msra.mxu0 0.0
      %446 = vmatprep.mubr.f32.mxu0 0.0
      %v447 = vand.u32 %v144, 4294901760
      %v448 = vsub.f32 %v144, %v447
      %v449 = vand.u32 %v448, 4294901760
      %450 = vmatmul.mubr.f32.gmra.mrb[0].mxu0 %v449
      %v451 = vpop.f32.mrb[0].mxu0
      %v452 = vadd.f32 %v377, %v451
      %v453 = vpop.f32.mrb[0].mxu0
      %454 = vdwg.mxu0
      %455 = vmatprep.subr.mxu0 0.0
      %v456 = vand.u32 %v140, 4294901760
      %v457 = vsub.f32 %v140, %v456
      %v458 = vand.u32 %v457, 4294901760
      %459 = vmatpush1.msra.mxu0 %v458
      %460 = vmatprep.subr.mxu0 0.0
      %v461 = vand.u32 %v141, 4294901760
      %v462 = vsub.f32 %v141, %v461
      %v463 = vand.u32 %v462, 4294901760
      %464 = vmatpush1.msra.mxu0 %v463
      %465 = vmatprep.subr.mxu0 0.0
      %466 = vmatpush1.msra.mxu0 0.0
      %467 = vmatprep.subr.mxu0 0.0
      %468 = vmatpush1.msra.mxu0 0.0
      %469 = vmatprep.subr.mxu0 0.0
      %470 = vmatpush1.msra.mxu0 0.0
      %471 = vmatprep.subr.mxu0 0.0
      %472 = vmatpush1.msra.mxu0 0.0
      %473 = vmatprep.subr.mxu0 0.0
      %474 = vmatpush1.msra.mxu0 0.0
      %475 = vmatprep.subr.mxu0 0.0
      %476 = vmatpush1.msra.mxu0 0.0
      %477 = vmatprep.subr.mxu0 0.0
      %478 = vmatpush1.msra.mxu0 0.0
      %479 = vmatprep.subr.mxu0 0.0
      %480 = vmatpush1.msra.mxu0 0.0
      %481 = vmatprep.subr.mxu0 0.0
      %482 = vmatpush1.msra.mxu0 0.0
      %483 = vmatprep.subr.mxu0 0.0
      %484 = vmatpush1.msra.mxu0 0.0
      %485 = vmatprep.subr.mxu0 0.0
      %486 = vmatpush1.msra.mxu0 0.0
      %487 = vmatprep.subr.mxu0 0.0
      %488 = vmatpush1.msra.mxu0 0.0
      %489 = vmatprep.subr.mxu0 0.0
      %490 = vmatpush1.msra.mxu0 0.0
      %491 = vmatprep.subr.mxu0 0.0
      %492 = vmatpush1.msra.mxu0 0.0
      %493 = vmatprep.subr.mxu0 0.0
      %494 = vmatpush1.msra.mxu0 0.0
      %495 = vmatprep.subr.mxu0 0.0
      %496 = vmatpush1.msra.mxu0 0.0
      %497 = vmatprep.subr.mxu0 0.0
      %498 = vmatpush1.msra.mxu0 0.0
      %499 = vmatprep.subr.mxu0 0.0
      %500 = vmatpush1.msra.mxu0 0.0
      %501 = vmatprep.subr.mxu0 0.0
      %502 = vmatpush1.msra.mxu0 0.0
      %503 = vmatprep.subr.mxu0 0.0
      %504 = vmatpush1.msra.mxu0 0.0
      %505 = vmatprep.subr.mxu0 0.0
      %506 = vmatpush1.msra.mxu0 0.0
      %507 = vmatprep.subr.mxu0 0.0
      %508 = vmatpush1.msra.mxu0 0.0
      %509 = vmatprep.subr.mxu0 0.0
      %510 = vmatpush1.msra.mxu0 0.0
      %511 = vmatprep.subr.mxu0 0.0
      %512 = vmatpush1.msra.mxu0 0.0
      %513 = vmatprep.subr.mxu0 0.0
      %514 = vmatpush1.msra.mxu0 0.0
      %515 = vmatprep.subr.mxu0 0.0
      %516 = vmatpush1.msra.mxu0 0.0
      %517 = vmatprep.subr.mxu0 0.0
      %518 = vmatpush1.msra.mxu0 0.0
      %519 = vmatprep.subr.mxu0 0.0
      %520 = vmatpush1.msra.mxu0 0.0
      %521 = vmatprep.subr.mxu0 0.0
      %522 = vmatpush1.msra.mxu0 0.0
      %523 = vmatprep.subr.mxu0 0.0
      %524 = vmatpush1.msra.mxu0 0.0
      %525 = vmatprep.mubr.f32.mxu0 0.0
      %v526 = vand.u32 %v144, 4294901760
      %527 = vmatmul.mubr.f32.gmra.mrb[0].mxu0 %v526
      %v528 = vpop.f32.mrb[0].mxu0
      %v529 = vadd.f32 %v452, %v528
      %v530 = vpop.f32.mrb[0].mxu0
      %531 = vdwg.mxu0
      %532 = vmatprep.subr.mxu0 0.0
      %v533 = vand.u32 %v140, 4294901760
      %534 = vmatpush1.msra.mxu0 %v533
      %535 = vmatprep.subr.mxu0 0.0
      %v536 = vand.u32 %v141, 4294901760
      %537 = vmatpush1.msra.mxu0 %v536
      %538 = vmatprep.subr.mxu0 0.0
      %539 = vmatpush1.msra.mxu0 0.0
      %540 = vmatprep.subr.mxu0 0.0
      %541 = vmatpush1.msra.mxu0 0.0
      %542 = vmatprep.subr.mxu0 0.0
      %543 = vmatpush1.msra.mxu0 0.0
      %544 = vmatprep.subr.mxu0 0.0
      %545 = vmatpush1.msra.mxu0 0.0
      %546 = vmatprep.subr.mxu0 0.0
      %547 = vmatpush1.msra.mxu0 0.0
      %548 = vmatprep.subr.mxu0 0.0
      %549 = vmatpush1.msra.mxu0 0.0
      %550 = vmatprep.subr.mxu0 0.0
      %551 = vmatpush1.msra.mxu0 0.0
      %552 = vmatprep.subr.mxu0 0.0
      %553 = vmatpush1.msra.mxu0 0.0
      %554 = vmatprep.subr.mxu0 0.0
      %555 = vmatpush1.msra.mxu0 0.0
      %556 = vmatprep.subr.mxu0 0.0
      %557 = vmatpush1.msra.mxu0 0.0
      %558 = vmatprep.subr.mxu0 0.0
      %559 = vmatpush1.msra.mxu0 0.0
      %560 = vmatprep.subr.mxu0 0.0
      %561 = vmatpush1.msra.mxu0 0.0
      %562 = vmatprep.subr.mxu0 0.0
      %563 = vmatpush1.msra.mxu0 0.0
      %564 = vmatprep.subr.mxu0 0.0
      %565 = vmatpush1.msra.mxu0 0.0
      %566 = vmatprep.subr.mxu0 0.0
      %567 = vmatpush1.msra.mxu0 0.0
      %568 = vmatprep.subr.mxu0 0.0
      %569 = vmatpush1.msra.mxu0 0.0
      %570 = vmatprep.subr.mxu0 0.0
      %571 = vmatpush1.msra.mxu0 0.0
      %572 = vmatprep.subr.mxu0 0.0
      %573 = vmatpush1.msra.mxu0 0.0
      %574 = vmatprep.subr.mxu0 0.0
      %575 = vmatpush1.msra.mxu0 0.0
      %576 = vmatprep.subr.mxu0 0.0
      %577 = vmatpush1.msra.mxu0 0.0
      %578 = vmatprep.subr.mxu0 0.0
      %579 = vmatpush1.msra.mxu0 0.0
      %580 = vmatprep.subr.mxu0 0.0
      %581 = vmatpush1.msra.mxu0 0.0
      %582 = vmatprep.subr.mxu0 0.0
      %583 = vmatpush1.msra.mxu0 0.0
      %584 = vmatprep.subr.mxu0 0.0
      %585 = vmatpush1.msra.mxu0 0.0
      %586 = vmatprep.subr.mxu0 0.0
      %587 = vmatpush1.msra.mxu0 0.0
      %588 = vmatprep.subr.mxu0 0.0
      %589 = vmatpush1.msra.mxu0 0.0
      %590 = vmatprep.subr.mxu0 0.0
      %591 = vmatpush1.msra.mxu0 0.0
      %592 = vmatprep.subr.mxu0 0.0
      %593 = vmatpush1.msra.mxu0 0.0
      %594 = vmatprep.subr.mxu0 0.0
      %595 = vmatpush1.msra.mxu0 0.0
      %596 = vmatprep.subr.mxu0 0.0
      %597 = vmatpush1.msra.mxu0 0.0
      %598 = vmatprep.mubr.f32.mxu0 0.0
      %v599 = vand.u32 %v144, 4294901760
      %600 = vmatmul.mubr.f32.gmra.mrb[0].mxu0 %v599
      %v601 = vpop.f32.mrb[0].mxu0
      %v602 = vadd.f32 %v529, %v601
      %v603 = vpop.f32.mrb[0].mxu0
      %604 = vdwg.mxu0
      %v605 = vand.u32 2147483647, %v602
      %vm606 = vcmp.le.f32.partialorder %v605, 0.7853982
      %vm607 = vcmp.lt.s32.totalorder %v602, 0
      %v608 = vand.u32 %v602, 2139095040
      %v609 = vshrl.u32 %v608, 23
      %v610 = vsub.s32 %v609, 127
      %v611 = vand.u32 2147483647, %v602
      %v612 = vand.u32 %v611, 8388607
      %v613 = vor.u32 %v612, 8388608
      %v614 = vsub.s32 0, %v613
      %v615 = vadd.s32 %v610, 1
      %vm616 = vcmp.gt.s32.totalorder %v615, 0
      %v617 = vsel %vm616, %v615, 0
      %v618 = vshrl.u32 %v617, 5
      %v619 = vand.u32 %v617, 31
      %v620 = vsub.s32 32, %v619
      %v621 = vshrl.u32 683565275, %v620
      %v622 = vshll.u32 683565275, %v619
      %v623 = vshrl.u32 2475754826, %v620
      %v624 = vor.u32 %v622, %v623
      %v625 = vshll.u32 2475754826, %v619
      %v626 = vshrl.u32 2131351028, %v620
      %v627 = vor.u32 %v625, %v626
      %v628 = vshll.u32 2131351028, %v619
      %v629 = vshrl.u32 2102212464, %v620
      %v630 = vor.u32 %v628, %v629
      %v631 = vshll.u32 2102212464, %v619
      %v632 = vshrl.u32 920167782, %v620
      %v633 = vor.u32 %v631, %v632
      %v634 = vshll.u32 920167782, %v619
      %v635 = vshrl.u32 1326507024, %v620
      %v636 = vor.u32 %v634, %v635
      %vm637 = vcmp.lt.s32.totalorder %v618, 1
      %vm638 = vcmp.lt.s32.totalorder %v618, 2
      %vm639 = vcmp.lt.s32.totalorder %v618, 3
      %vm640 = vcmp.lt.s32.totalorder %v618, 4
      %v641 = vsel %vm637, %v621, %v624
      %v642 = vsel %vm640, %v630, 2102212464
      %v643 = vsel %vm639, %v627, %v642
      %v644 = vsel %vm638, %v641, %v643
      %v645 = vsel %vm637, %v624, %v627
      %v646 = vsel %vm640, %v633, 920167782
      %v647 = vsel %vm639, %v630, %v646
      %v648 = vsel %vm638, %v645, %v647
      %v649 = vsel %vm637, %v627, %v630
      %v650 = vsel %vm640, %v636, 1326507024
      %v651 = vsel %vm639, %v633, %v650
      %v652 = vsel %vm638, %v649, %v651
      %v653 = vshll.u32 %v613, 8
      %v654 = vmul.u32.u64.compose %v653, %v652
      %v655 = vextract.low.u32 %v654
      %v656 = vextract.high.u32 %v654
      %v657 = vmul.u32.u64.compose %v653, %v648
      %v658 = vextract.low.u32 %v657
      %v659 = vextract.high.u32 %v657
      %v660 = vmul.u32 %v653, %v644
      %v661 = vadd.s32 %v656, %v658
      %vm662 = vc.u32 %v656, %v658
      %v663 = vadd.s32 %v659, 1
      %v664 = vsel %vm662, %v663, %v659
      %v665 = vadd.s32 %v660, %v664
      %v666 = vadd.s32 %v665, 536870912
      %v667 = vshrl.u32 %v666, 30
      %v668 = vshll.u32 %v667, 30
      %v669 = vsub.s32 %v665, %v668
      %vm670 = vcmp.lt.s32.totalorder %v669, 0
      %v671 = vsub.s32 0, %v669
      %v672 = vsel %vm670, %v671, %v669
      %v673 = vclz %v672
      %v674 = vsub.s32 %v673, 2
      %vm675 = vcmp.gt.s32.totalorder 0, %v674
      %v676 = vsel %vm675, 0, %v674
      %v677 = vsub.s32 32, %v676
      %v678 = vshll.u32 %v669, %v676
      %v679 = vshrl.u32 %v661, %v677
      %v680 = vor.u32 %v678, %v679
      %v681 = vsub.s32 4294967266, %v676
      %v682 = vadd.s32 %v681, 127
      %v683 = vshll.u32 %v682, 23
      %v684 = vor.u32 4788187, %v683
      %v685 = vand.u32 2147483647, %v684
      %v687 = vcvt.s32.f32 %v680
      %v688 = vmul.f32 %v687, %v685
      %v689 = vxor.u32 %v688, 2147483648
      %v690 = vsel %vm607, %v689, %v688
      %v691 = vsub.s32 4, %v667
      %v692 = vsel %vm607, %v691, %v667
      %v693 = vsel %vm606, %v602, %v690
      %v694 = vsel %vm606, 0, %v692
      %v695 = vcosq.f32.pop %v693
      %v696 = vsinq.f32.pop %v693
      %vm697 = vweird.f32 %v602
      %v698 = vadd.s32 %v694, 3
      %v699 = vand.u32 %v698, 3
      %vm700 = vcmp.lt.s32.totalorder %v699, 2
      %vm701 = vcmp.eq.s32.totalorder %v699, 0
      %v702 = vxor.u32 %v696, 2147483648
      %v703 = vsel %vm701, %v695, %v702
      %vm704 = vcmp.eq.s32.totalorder %v699, 2
      %v705 = vxor.u32 %v695, 2147483648
      %v706 = vsel %vm704, %v705, %v696
      %v707 = vsel %vm700, %v703, %v706
      %v708 = vsel %vm697, nan, %v707
      %709 = vst [vmem:[%s138] sm:$0xff] %v708
      %p710 = scmp.lt.s32.totalorder %s13, 1
      %s711 = scalar_select %p710, %s13, 1
      %s712 = smul.addr %s711, 8
      %s713 = scalar_lea.vmem %s2, %s712
      // Predicated region
      $region29: #{build_spatial_pe.1} parent=27 // pred_check
        %p714 = pneg %p78
      $region30: #{build_spatial_pe.1} parent=27 // pred_check_branch
        %716 = sbr.rel (%p714) target = $region32
      $region31: #{build_spatial_pe.1} parent=27 // pred_region
        _
      $region32: #{build_spatial_pe.1} parent=27 // pred_fallthru
        _
    $region28: #{build_spatial_pe.1} parent=5 // pred_fallthru
      _
    %p717 = scmp.le.s32.totalorder 2, %s8
    // Predicated region
    $region33: #{build_spatial_pe.1} parent=5 // pred_check
      %p718 = pneg %p717
    $region34: #{build_spatial_pe.1} parent=5 // pred_check_branch
      %720 = sbr.rel (%p718) target = $region36
    $region35: #{build_spatial_pe.1} parent=5 // pred_region
      %s721 = ssub.s32 %s8, 2
      // Predicated region
      $region37: #{build_spatial_pe.1} parent=35 // pred_check
        %p722 = pneg %p84
      $region38: #{build_spatial_pe.1} parent=35 // pred_check_branch
        %724 = sbr.rel (%p722) target = $region40
      $region39: #{build_spatial_pe.1} parent=35 // pred_region
        %p725 = scmp.lt.s32.totalorder %s14, 1
        %s726 = scalar_select %p725, %s14, 1
        %s727 = smul.addr %s726, 8
        %s728 = scalar_lea.vmem %s2, %s727
      $region40: #{build_spatial_pe.1} parent=35 // pred_fallthru
        _
    $region36: #{build_spatial_pe.1} parent=5 // pred_fallthru
      _
  $region6: #{build_spatial_pe.1} parent=0 // loop_footer
    %s12 = sadd.s32 1, %s8
  $region7: #{build_spatial_pe.1} parent=0 // loop_footer_branch
    %7 = sbr.rel target = $region3
  $region8: #{build_spatial_pe.1} parent=0 // loop_exit
    _

</llo_original>
